<compile_context>
chip_gen: v5e
topology: v5e:2x2
jax: 0.10.0
libtpu: 0.0.40
codegen_flags: <defaults>
</compile_context>

<pallas_src>
import jax
import jax.numpy as jnp
from jax.experimental import pallas as pl
from jax.experimental.pallas import tpu as pltpu

# Synthetic small "config" consistent with the module's forward semantics.
BATCH_SIZE = 2
WORD_DIM = 16
SEQ_LEN = 8
NUM_FILTERS = 8
FILTER_SIZES = (2, 3, 4)
NUM_CLASS = 4

_NUM_FS = len(FILTER_SIZES)
_NFEAT = _NUM_FS * NUM_FILTERS               # 24  (real feature columns)
_NFEAT_PAD = 32                              # feature cols padded to a sublane multiple
_K_PAD = 128                                 # packed contraction dim, lane-aligned
_L_PAD = 8                                   # window axis padded to one sublane group
_NC_PAD = 128                                # lane-dense output width

# Robustness: all real conv windows must fit in the padded window axis.
assert SEQ_LEN - min(FILTER_SIZES) + 1 <= _L_PAD, "increase _L_PAD (multiple of 8)"
assert max(FILTER_SIZES) * WORD_DIM + 1 <= _K_PAD, "increase _K_PAD (multiple of 128)"
assert _NFEAT + 1 <= _NFEAT_PAD


def _make_textnet_kernel(batch, num_fs, l_pad, nf, nfeat, nfeat_pad):
    def kernel(x_ref, w_ref, fcp_ref, out_ref):
        # Fused conv-as-GEMM for all filter sizes; conv biases ride on lane 127 of x_all
        # (ones column) / row 127 of w_all, so the bias-add happens inside the MXU pass.
        s = jnp.dot(x_ref[...], w_ref[...], preferred_element_type=jnp.float32)
        s = jnp.maximum(s, 0.0)                                    # ReLU

        # Max-pool over window positions per (batch, branch).  Padded window rows are
        # all-zero (bias lane included) -> ReLU gives exactly 0, never exceeding the
        # non-negative real activations.  The reshape splits rows only at 8-row
        # boundaries (l_pad == 8), so it stays a view.
        s = s.reshape(batch, num_fs, l_pad, nfeat_pad)
        pooled = jnp.max(s, axis=2)                                # [batch, num_fs, nfeat_pad]

        # Select each branch's own NF-column block (off-diagonal blocks hold garbage from
        # the zero-padded K columns and are never selected).  Column NFEAT is forced to
        # 1.0 so the FC bias (row NFEAT of fcp) is folded into the second GEMM; columns
        # NFEAT+1.. are exactly 0 (zero weight columns) and hit zero rows of fcp.
        cid = jax.lax.broadcasted_iota(jnp.int32, (batch, nfeat_pad), 1)
        feat = pooled[:, num_fs - 1, :]
        for i in range(num_fs - 2, -1, -1):
            feat = jnp.where(cid < (i + 1) * nf, pooled[:, i, :], feat)
        feat = jnp.where(cid == nfeat, 1.0, feat)                  # FC bias column

        # dropout(p=0.5) is identity in eval mode.
        # Lane-dense [B, 128] store; wrapper slices the first NUM_CLASS columns.
        out_ref[...] = jnp.dot(feat, fcp_ref[...],
                               preferred_element_type=jnp.float32)

    return kernel


_KERNEL = _make_textnet_kernel(BATCH_SIZE, _NUM_FS, _L_PAD, NUM_FILTERS,
                               _NFEAT, _NFEAT_PAD)


def pack_weights(params):
    """Parameter-only packing. Call ONCE per set of params and reuse the result."""
    # W_all: per-branch weights in rows 0..k-1, zeros up to row 126, bias in row 127;
    # columns 24..31 are zero padding (their activations are exactly 0 post-ReLU).
    w_cols = []
    for fs in FILTER_SIZES:
        w, b = params['conv_%d' % fs]                              # [NF, 1, fs*WD], [NF]
        k = fs * WORD_DIM
        wt = jnp.concatenate(
            [jnp.transpose(w[:, 0, :]).astype(jnp.float32),        # [fs*WD, NF]
             jnp.zeros((_K_PAD - 1 - k, NUM_FILTERS), jnp.float32),
             b.reshape(1, NUM_FILTERS).astype(jnp.float32)],       # bias row 127
            axis=0)                                                # [128, NF]
        w_cols.append(wt)
    w_all = jnp.concatenate(w_cols, axis=1)                        # [128, NFEAT]
    w_all = jnp.pad(w_all, ((0, 0), (0, _NFEAT_PAD - _NFEAT)))     # [128, 32]

    # FC weight + bias packed into one lane-dense array: rows 0..23 = W, row 24 = b,
    # remaining rows / columns beyond NUM_CLASS are zero.
    fcp = jnp.zeros((_NFEAT_PAD, _NC_PAD), jnp.float32)
    fcp = fcp.at[:_NFEAT, :NUM_CLASS].set(params['fc_w'].astype(jnp.float32))
    fcp = fcp.at[_NFEAT, :NUM_CLASS].set(params['fc_b'].astype(jnp.float32))
    return w_all, fcp


def _pack_x(x):
    """im2col + zero-padding + bias lane -> one contiguous, lane-aligned [B*3*L_PAD, 128]."""
    B = x.shape[0]
    xs = x.reshape(B, SEQ_LEN, WORD_DIM).astype(jnp.float32)
    blocks = []
    for fs in FILTER_SIZES:
        L = SEQ_LEN - fs + 1
        k = fs * WORD_DIM
        # im2col: window l == xs[:, l:l+fs, :] flattened  -> [B, L, fs*WD]
        xw = jnp.concatenate([xs[:, j:j + L, :] for j in range(fs)], axis=-1)
        xw = jnp.concatenate(
            [xw,
             jnp.zeros((B, L, _K_PAD - 1 - k), jnp.float32),       # pad K to 127
             jnp.ones((B, L, 1), jnp.float32)],                    # bias lane 127
            axis=-1)                                               # [B, L, 128]
        xw = jnp.pad(xw, ((0, 0), (0, _L_PAD - L), (0, 0)))        # pad window axis (all-zero rows)
        blocks.append(xw)
    return jnp.stack(blocks, axis=1).reshape(B * _NUM_FS * _L_PAD, _K_PAD)


def _forward_impl(x, w_all, fcp):
    """x: [B, 1, SEQ_LEN*WORD_DIM] f32, packed weights -> [B, NUM_CLASS] f32 (eval mode)."""
    B = x.shape[0]
    x_all = _pack_x(x)
    vmem = pl.BlockSpec(memory_space=pltpu.MemorySpace.VMEM)
    out_pad = pl.pallas_call(
        _KERNEL,
        out_shape=jax.ShapeDtypeStruct((B, _NC_PAD), jnp.float32),
        in_specs=[vmem, vmem, vmem],
        out_specs=vmem,
    )(x_all, w_all, fcp)
    return out_pad[:, :NUM_CLASS]


# Jit the whole x-dependent path so the im2col packing + final slice fuse into one program.
textnet_forward = jax.jit(_forward_impl)


def init_params(key):
    """Deterministic synthetic init matching PyTorch layer shapes."""
    params = {}
    for fs in FILTER_SIZES:
        key, k1, k2 = jax.random.split(key, 3)
        fan_in = 1 * fs * WORD_DIM
        bound = 1.0 / (fan_in ** 0.5)
        w = jax.random.uniform(k1, (NUM_FILTERS, 1, fs * WORD_DIM),
                               minval=-bound, maxval=bound, dtype=jnp.float32)
        b = jax.random.uniform(k2, (NUM_FILTERS,),
                               minval=-bound, maxval=bound, dtype=jnp.float32)
        params['conv_%d' % fs] = (w, b)
    key, k1, k2 = jax.random.split(key, 3)
    fan_in = NUM_FILTERS * len(FILTER_SIZES)
    bound = 1.0 / (fan_in ** 0.5)
    params['fc_w'] = jax.random.uniform(k1, (fan_in, NUM_CLASS),
                                        minval=-bound, maxval=bound, dtype=jnp.float32)
    params['fc_b'] = jax.random.uniform(k2, (NUM_CLASS,),
                                        minval=-bound, maxval=bound, dtype=jnp.float32)
    return params


def ref_forward(x, params):
    """Pure-JAX reference mirroring the PyTorch forward (eval mode)."""
    feats = []
    for fs in FILTER_SIZES:
        w, b = params['conv_%d' % fs]
        t = jax.lax.conv_general_dilated(
            x, w, window_strides=(WORD_DIM,), padding='VALID',
            dimension_numbers=('NCH', 'OIH', 'NCH'))
        t = t + b[None, :, None]
        t = jnp.maximum(t, 0.0)
        t = jnp.max(t, axis=-1)                          # max_pool1d over (SEQ_LEN - fs + 1)
        feats.append(t)
    feat = jnp.concatenate(feats, axis=1)                # [B, NF*len(FS)]
    return feat @ params['fc_w'] + params['fc_b']


if __name__ == "__main__":
    key = jax.random.PRNGKey(0)
    pkey, xkey = jax.random.split(key)
    params = init_params(pkey)
    x = jax.random.normal(xkey, (BATCH_SIZE, 1, SEQ_LEN * WORD_DIM), dtype=jnp.float32)

    # Hoisted, param-only packing: done once, reused across calls.
    w_all, fcp = pack_weights(params)
    w_all, fcp = jax.block_until_ready((w_all, fcp))

    out = textnet_forward(x, w_all, fcp)
    out = jax.block_until_ready(out)

    ref = ref_forward(x, params)
    assert out.shape == (BATCH_SIZE, NUM_CLASS), out.shape
    assert jnp.allclose(out, ref, atol=1e-4, rtol=1e-4), (out, ref)
    print("KERNEL_OK")
</pallas_src>

<mosaic_0001>
module attributes {stable_mosaic.version = 11 : i64} {
  func.func @kernel(%arg0: memref<48x128xf32, #tpu.memory_space<vmem>>, %arg1: memref<128x32xf32, #tpu.memory_space<vmem>>, %arg2: memref<32x128xf32, #tpu.memory_space<vmem>>, %arg3: memref<2x128xf32, #tpu.memory_space<vmem>>) attributes {dimension_semantics = [], scalar_prefetch = 0 : i64, scratch_operands = 0 : i64, tpu.core_type = #tpu.core_type<tc>} {
    %c0 = arith.constant 0 : index
    %c0_0 = arith.constant 0 : index
    %0 = vector.load %arg0[%c0, %c0_0] : memref<48x128xf32, #tpu.memory_space<vmem>>, vector<48x128xf32>
    %c0_1 = arith.constant 0 : index
    %c0_2 = arith.constant 0 : index
    %1 = vector.load %arg1[%c0_1, %c0_2] : memref<128x32xf32, #tpu.memory_space<vmem>>, vector<128x32xf32>
    %cst = arith.constant dense<0.000000e+00> : vector<48x32xf32>
    %2 = tpu.matmul %0, %1, %cst {dimension_numbers = #tpu.dot_dimension_numbers<[1], [0], [0], [1], [0, 0, 1, 1], [], []>} : vector<48x128xf32>, vector<128x32xf32>, vector<48x32xf32> -> vector<48x32xf32>
    %cst_3 = arith.constant 0.000000e+00 : f32
    %3 = vector.broadcast %cst_3 : f32 to vector<48x32xf32>
    %4 = arith.maximumf %2, %3 : vector<48x32xf32>
    %5 = vector.shape_cast %4 : vector<48x32xf32> to vector<2x3x8x32xf32>
    %cst_4 = arith.constant dense<0xFF800000> : vector<2x3x32xf32>
    %6 = vector.multi_reduction <maximumf>, %5, %cst_4 [2] : vector<2x3x8x32xf32> to vector<2x3x32xf32>
    %7 = tpu.iota {dimensions = array<i32: 1>} : vector<2x32xi32>
    %8 = vector.extract_strided_slice %6 {offsets = [0, 2, 0], sizes = [2, 1, 32], strides = [1, 1, 1]} : vector<2x3x32xf32> to vector<2x1x32xf32>
    %9 = vector.shape_cast %8 : vector<2x1x32xf32> to vector<2x32xf32>
    %c16_i32 = arith.constant 16 : i32
    %10 = vector.broadcast %c16_i32 : i32 to vector<2x32xi32>
    %11 = arith.cmpi slt, %7, %10 : vector<2x32xi32>
    %12 = vector.extract_strided_slice %6 {offsets = [0, 1, 0], sizes = [2, 1, 32], strides = [1, 1, 1]} : vector<2x3x32xf32> to vector<2x1x32xf32>
    %13 = vector.shape_cast %12 : vector<2x1x32xf32> to vector<2x32xf32>
    %14 = arith.select %11, %13, %9 : vector<2x32xi1>, vector<2x32xf32>
    %c8_i32 = arith.constant 8 : i32
    %15 = vector.broadcast %c8_i32 : i32 to vector<2x32xi32>
    %16 = arith.cmpi slt, %7, %15 : vector<2x32xi32>
    %17 = vector.extract_strided_slice %6 {offsets = [0, 0, 0], sizes = [2, 1, 32], strides = [1, 1, 1]} : vector<2x3x32xf32> to vector<2x1x32xf32>
    %18 = vector.shape_cast %17 : vector<2x1x32xf32> to vector<2x32xf32>
    %19 = arith.select %16, %18, %14 : vector<2x32xi1>, vector<2x32xf32>
    %c24_i32 = arith.constant 24 : i32
    %20 = vector.broadcast %c24_i32 : i32 to vector<2x32xi32>
    %21 = arith.cmpi eq, %7, %20 : vector<2x32xi32>
    %cst_5 = arith.constant 1.000000e+00 : f32
    %22 = vector.broadcast %cst_5 : f32 to vector<2x32xf32>
    %23 = arith.select %21, %22, %19 : vector<2x32xi1>, vector<2x32xf32>
    %c0_6 = arith.constant 0 : index
    %c0_7 = arith.constant 0 : index
    %24 = vector.load %arg2[%c0_6, %c0_7] : memref<32x128xf32, #tpu.memory_space<vmem>>, vector<32x128xf32>
    %cst_8 = arith.constant dense<0.000000e+00> : vector<2x128xf32>
    %25 = tpu.matmul %23, %24, %cst_8 {dimension_numbers = #tpu.dot_dimension_numbers<[1], [0], [0], [1], [0, 0, 1, 1], [], []>} : vector<2x32xf32>, vector<32x128xf32>, vector<2x128xf32> -> vector<2x128xf32>
    %c0_9 = arith.constant 0 : index
    %c0_10 = arith.constant 0 : index
    %26 = vector.load %arg3[%c0_9, %c0_10] : memref<2x128xf32, #tpu.memory_space<vmem>>, vector<2x128xf32>
    tpu.vector_store %arg3[%c0_9, %c0_10], %25 {strides = array<i32>} : memref<2x128xf32, #tpu.memory_space<vmem>>, vector<2x128xf32>,
    return
  }
}

</mosaic_0001>

<llo_original>
// kernel: _forward_impl.1
$region0: #{_forward_impl.1}
  #allocation0 [shape = 'u32[]', space=smem, size = 0x4, offset = 0x4, fixed_abs, tag = 'smem constant byte address 0x4 - core index']
  #allocation1 [shape = 'u32[72,128]{1,0:T(1,128)}', space=vmem, size = 0x9000, scoped, tag = 'internal scratch']
  %s0 = inlined_call_operand.vmem [shape: f32[48,128], index: 0, kind: input, shape index: {}]
  %s1 = inlined_call_operand.vmem [shape: f32[128,32], index: 1, kind: input, shape index: {}]
  %s2 = inlined_call_operand.vmem [shape: f32[32,128], index: 2, kind: input, shape index: {}]
  %s3 = inlined_call_operand.hbm [shape: f32[2,128], index: 3, kind: output, shape index: {}]
  %s4 = sld [smem:[#allocation0]]
  $region22: #{_forward_impl.1} parent=0
    _
  %s6 = ssub.s32 1, %s4
  %s7 = scalar_select 0, %s6, %s4
  $region1: #{_forward_impl.1} parent=0
    #allocation2 [shape = 'u8[1024]{0}', space=vmem, size = 0x400, scoped, tag = 'output window, operand 0, single buffered']
    #allocation3 [shape = 's32[1]{0}', space=sflag, size = 0x4, scoped, tag = 'scoped memory for _forward_impl.1']
    %8 = vsyncpa [#allocation3], 0
    // Predicated region
    $region2: #{_forward_impl.1} parent=1 // pred_check
      _
    $region3: #{_forward_impl.1} parent=1 // pred_check_branch
      %10 = sbr.rel (0) target = $region5
    $region4: #{_forward_impl.1} parent=1 // pred_region
      _
    $region5: #{_forward_impl.1} parent=1 // pred_fallthru
      _
    // Predicated region
    $region6: #{_forward_impl.1} parent=1 // pred_check
      _
    $region7: #{_forward_impl.1} parent=1 // pred_check_branch
      %12 = sbr.rel (0) target = $region9
    $region8: #{_forward_impl.1} parent=1 // pred_region
      _
    $region9: #{_forward_impl.1} parent=1 // pred_fallthru
      _
    // Predicated region
    $region10: #{_forward_impl.1} parent=1 // pred_check
      _
    $region11: #{_forward_impl.1} parent=1 // pred_check_branch
      %14 = sbr.rel (0) target = $region13
    $region12: #{_forward_impl.1} parent=1 // pred_region
      _
    $region13: #{_forward_impl.1} parent=1 // pred_fallthru
      _
    %v15 = vld [vmem:[%s0] sm:$0xff]
    %v16 = vld [vmem:[%s0 + $0x8] sm:$0xff]
    %v17 = vld [vmem:[%s0 + $0x10] sm:$0xff]
    %v18 = vld [vmem:[%s0 + $0x18] sm:$0xff]
    %v19 = vld [vmem:[%s0 + $0x20] sm:$0xff]
    %v20 = vld [vmem:[%s0 + $0x28] sm:$0xff]
    %v21 = vld [vmem:[%s1] sm:$0xff]
    %v22 = vld [vmem:[%s1 + $0x8] sm:$0xff]
    %v23 = vld [vmem:[%s1 + $0x10] sm:$0xff]
    %v24 = vld [vmem:[%s1 + $0x18] sm:$0xff]
    %v25 = vld [vmem:[%s1 + $0x20] sm:$0xff]
    %v26 = vld [vmem:[%s1 + $0x28] sm:$0xff]
    %v27 = vld [vmem:[%s1 + $0x30] sm:$0xff]
    %v28 = vld [vmem:[%s1 + $0x38] sm:$0xff]
    %v29 = vld [vmem:[%s1 + $0x40] sm:$0xff]
    %v30 = vld [vmem:[%s1 + $0x48] sm:$0xff]
    %v31 = vld [vmem:[%s1 + $0x50] sm:$0xff]
    %v32 = vld [vmem:[%s1 + $0x58] sm:$0xff]
    %v33 = vld [vmem:[%s1 + $0x60] sm:$0xff]
    %v34 = vld [vmem:[%s1 + $0x68] sm:$0xff]
    %v35 = vld [vmem:[%s1 + $0x70] sm:$0xff]
    %v36 = vld [vmem:[%s1 + $0x78] sm:$0xff]
    %37 = vmatpush.msra.mxu0 %v36
    %38 = vmatpush.msra.mxu0 %v35
    %39 = vmatpush.msra.mxu0 %v34
    %40 = vmatpush.msra.mxu0 %v33
    %41 = vmatpush.msra.mxu0 %v32
    %42 = vmatpush.msra.mxu0 %v31
    %43 = vmatpush.msra.mxu0 %v30
    %44 = vmatpush.msra.mxu0 %v29
    %45 = vmatpush.msra.mxu0 %v28
    %46 = vmatpush.msra.mxu0 %v27
    %47 = vmatpush.msra.mxu0 %v26
    %48 = vmatpush.msra.mxu0 %v25
    %49 = vmatpush.msra.mxu0 %v24
    %50 = vmatpush.msra.mxu0 %v23
    %51 = vmatpush.msra.mxu0 %v22
    %52 = vmatpush.msra.mxu0 %v21
    %53 = vmatmul.f32.gmra.mxu0 %v15
    %v54 = vpop.f32.mrf.mxu0
    %v55 = vadd.f32 0.0, %v54
    %56 = vmatmul.f32.gmra.mxu0 %v16
    %v57 = vpop.f32.mrf.mxu0
    %v58 = vadd.f32 0.0, %v57
    %59 = vmatmul.f32.gmra.mxu0 %v17
    %v60 = vpop.f32.mrf.mxu0
    %v61 = vadd.f32 0.0, %v60
    %62 = vmatmul.f32.gmra.mxu0 %v18
    %v63 = vpop.f32.mrf.mxu0
    %v64 = vadd.f32 0.0, %v63
    %65 = vmatmul.f32.gmra.mxu0 %v19
    %v66 = vpop.f32.mrf.mxu0
    %v67 = vadd.f32 0.0, %v66
    %68 = vmatmul.f32.gmra.mxu0 %v20
    %v69 = vpop.f32.mrf.mxu0
    %v70 = vadd.f32 0.0, %v69
    %71 = vdwg.mxu0
    %v72 = vmax.f32 %v55, 0.0
    %v73 = vmax.f32 %v58, 0.0
    %v74 = vmax.f32 %v61, 0.0
    %v75 = vmax.f32 %v64, 0.0
    %v76 = vmax.f32 %v67, 0.0
    %v77 = vmax.f32 %v70, 0.0
    %vm78 = vcmask 261120
    %v79 = vsel %vm78, %v72, -inf
    %v80 = vrot.slane %v79, 4
    %v81 = vmax.f32 %v79, %v80
    %v82 = vrot.slane %v81, 2
    %v83 = vmax.f32 %v81, %v82
    %v84 = vrot.slane %v83, 1
    %v85 = vmax.f32 %v83, %v84
    %v86 = vsel %vm78, %v73, -inf
    %v87 = vrot.slane %v86, 4
    %v88 = vmax.f32 %v86, %v87
    %v89 = vrot.slane %v88, 2
    %v90 = vmax.f32 %v88, %v89
    %v91 = vrot.slane %v90, 1
    %v92 = vmax.f32 %v90, %v91
    %v93 = vsel %vm78, %v74, -inf
    %v94 = vrot.slane %v93, 4
    %v95 = vmax.f32 %v93, %v94
    %v96 = vrot.slane %v95, 2
    %v97 = vmax.f32 %v95, %v96
    %v98 = vrot.slane %v97, 1
    %v99 = vmax.f32 %v97, %v98
    %v100 = vsel %vm78, %v75, -inf
    %v101 = vrot.slane %v100, 4
    %v102 = vmax.f32 %v100, %v101
    %v103 = vrot.slane %v102, 2
    %v104 = vmax.f32 %v102, %v103
    %v105 = vrot.slane %v104, 1
    %v106 = vmax.f32 %v104, %v105
    %v107 = vsel %vm78, %v76, -inf
    %v108 = vrot.slane %v107, 4
    %v109 = vmax.f32 %v107, %v108
    %v110 = vrot.slane %v109, 2
    %v111 = vmax.f32 %v109, %v110
    %v112 = vrot.slane %v111, 1
    %v113 = vmax.f32 %v111, %v112
    %v114 = vsel %vm78, %v77, -inf
    %v115 = vrot.slane %v114, 4
    %v116 = vmax.f32 %v114, %v115
    %v117 = vrot.slane %v116, 2
    %v118 = vmax.f32 %v116, %v117
    %v119 = vrot.slane %v118, 1
    %v120 = vmax.f32 %v118, %v119
    %v121 = vlaneseq
    %v122 = vand.u32 %v121, 127
    %vm123 = vcmp.lt.s32.totalorder %v122, 16
    %vm126 = vcmask 1041409
    %v127 = vsel %vm126, %v113, %v92
    %v131 = vsel %vm126, %v120, %v99
    %v133 = vsel %vm123, %v127, %v131
    %vm134 = vcmp.lt.s32.totalorder %v122, 8
    %v137 = vsel %vm126, %v106, %v85
    %v139 = vsel %vm134, %v137, %v133
    %vm140 = vcmp.eq.s32.totalorder %v122, 24
    %v141 = vsel %vm140, 1.0, %v139
    %v142 = vld [vmem:[%s2] sm:$0xff]
    %v143 = vld [vmem:[%s2 + $0x8] sm:$0xff]
    %v144 = vld [vmem:[%s2 + $0x10] sm:$0xff]
    %v145 = vld [vmem:[%s2 + $0x18] sm:$0xff]
    %v147 = vsel %vm78, %v141, 0
    %149 = vmatpush.msra.mxu0 0.0
    %150 = vmatpush.msra.mxu0 0.0
    %151 = vmatpush.msra.mxu0 0.0
    %152 = vmatpush.msra.mxu0 0.0
    %153 = vmatpush.msra.mxu0 0.0
    %154 = vmatpush.msra.mxu0 0.0
    %155 = vmatpush.msra.mxu0 0.0
    %156 = vmatpush.msra.mxu0 0.0
    %157 = vmatpush.msra.mxu0 0.0
    %158 = vmatpush.msra.mxu0 0.0
    %159 = vmatpush.msra.mxu0 0.0
    %160 = vmatpush.msra.mxu0 0.0
    %161 = vmatpush.msra.mxu0 %v145
    %162 = vmatpush.msra.mxu0 %v144
    %163 = vmatpush.msra.mxu0 %v143
    %164 = vmatpush.msra.mxu0 %v142
    %165 = vmatmul.f32.gmra.mxu0 %v147
    %v166 = vpop.f32.mrf.mxu0
    %v167 = vadd.f32 0.0, %v166
    %168 = vdwg.mxu0
    %169 = vst [vmem:[#allocation2] sm:$0x3] %v167
    // Predicated region
    $region14: #{_forward_impl.1} parent=1 // pred_check
      _
    $region15: #{_forward_impl.1} parent=1 // pred_check_branch
      %171 = sbr.rel (0) target = $region17
    $region16: #{_forward_impl.1} parent=1 // pred_region
      %173 = vsyncadd [#allocation3], 0
      %s175 = sshll.u32 [#allocation2], 4
      %s176 = int_to_ptr.vmem [resolvable:$true] %s175
      %s177 = sshll.u32 %s3, 4
      %s178 = int_to_ptr.hbm [resolvable:$true] %s177
      %180 = dma.vmem_to_hbm [thread:$0]  %s176, 32, %s178, [#allocation3]
    $region17: #{_forward_impl.1} parent=1 // pred_fallthru
      _
    // Predicated region
    $region18: #{_forward_impl.1} parent=1 // pred_check
      _
    $region19: #{_forward_impl.1} parent=1 // pred_check_branch
      %182 = sbr.rel (0) target = $region21
    $region20: #{_forward_impl.1} parent=1 // pred_region
      %184 = dma.done [#allocation3], 32
    $region21: #{_forward_impl.1} parent=1 // pred_fallthru
      _
    %185 = vsyncpa [#allocation3], 1

</llo_original>
